<compile_context>
chip_gen: v6e
topology: v6e:2x2x1
jax: 0.10.0
libtpu: 0.0.40
codegen_flags: <defaults>
</compile_context>

<pallas_src>
import math
import functools

import jax
import jax.numpy as jnp
from jax.experimental import pallas as pl
from jax.experimental.pallas import tpu as pltpu


def _fusion_kernel(x_ref, mask_ref, o_ref, *, scale):
    # x_ref: (TQ, Sk) score tile; mask_ref: (1, Sk) additive mask row; o_ref: (TQ, Sk).
    x = x_ref[...].astype(jnp.float32) * scale
    x = x + mask_ref[...].astype(jnp.float32)          # (1, Sk) broadcasts over TQ rows
    # numerically-stable softmax over the last (key) axis
    m = jnp.max(x, axis=-1, keepdims=True)
    e = jnp.exp(x - m)
    s = jnp.sum(e, axis=-1, keepdims=True)
    inv = pl.reciprocal(s, approx=True)                # EUP slot; frees VPU
    o_ref[...] = (e * inv).astype(o_ref.dtype)


def _choose_tq(rows, sk, itemsize, *, vmem_budget_bytes=32 << 20, max_rows=2048):
    """Largest row-tile dividing `rows` that respects sublane packing and the VMEM budget."""
    packing = max(1, 4 // itemsize)
    sublane = 8 * packing
    # Budget covers 2 double-buffered input tiles + 2 double-buffered output tiles.
    rows_by_vmem = max(sublane, vmem_budget_bytes // (4 * sk * itemsize))
    target = min(rows, rows_by_vmem, max_rows)
    best = None
    for tq in range(sublane, rows + 1, sublane):
        if rows % tq == 0 and tq <= target:
            best = tq
    return best if best is not None else rows          # fallback: full extent


def fusion_forward(inputs, mask, attention_head_size):
    """inputs: [B, H, Sq, Sk], mask: [B, 1, 1, Sk] -> softmax probs [B, H, Sq, Sk]."""
    B, H, Sq, Sk = inputs.shape
    scale = 1.0 / math.sqrt(attention_head_size)

    # Softmax is over Sk only and the mask broadcasts over (H, Sq), so collapsing heads
    # and query rows into a single row axis is a free (contiguous) relayout.
    R = H * Sq
    x2 = inputs.reshape(B, R, Sk)
    m2 = mask.reshape(B, 1, Sk)

    tq = _choose_tq(R, Sk, inputs.dtype.itemsize)
    grid = (B, R // tq)

    kernel = functools.partial(_fusion_kernel, scale=scale)

    out = pl.pallas_call(
        kernel,
        out_shape=jax.ShapeDtypeStruct((B, R, Sk), inputs.dtype),
        grid_spec=pltpu.PrefetchScalarGridSpec(
            num_scalar_prefetch=0,
            grid=grid,
            in_specs=[
                pl.BlockSpec((pl.Squeezed(), tq, Sk), lambda b, q: (b, q, 0)),
                # constant in q -> resident mask block is reused (no re-DMA per row tile)
                pl.BlockSpec((pl.Squeezed(), 1, Sk), lambda b, q: (b, 0, 0)),
            ],
            out_specs=pl.BlockSpec((pl.Squeezed(), tq, Sk), lambda b, q: (b, q, 0)),
        ),
        compiler_params=pltpu.CompilerParams(
            dimension_semantics=("parallel", "parallel"),
            vmem_limit_bytes=48 << 20,
        ),
    )(x2, m2)

    return out.reshape(B, H, Sq, Sk)


if __name__ == "__main__":
    # config: hidden_size=32, num_attention_heads=4 -> attention_head_size=8
    hidden_size = 32
    num_heads = 4
    head_size = hidden_size // num_heads

    B, H, S = 2, num_heads, 128  # small batch/heads; seq padded to lane width

    key = jax.random.PRNGKey(0)
    k1, k2 = jax.random.split(key)
    inputs = jax.random.normal(k1, (B, H, S, S), dtype=jnp.float32)
    # typical BERT additive attention mask: 0 for keep, -10000 for masked positions
    keep = (jax.random.uniform(k2, (B, 1, 1, S)) > 0.25).astype(jnp.float32)
    mask = (1.0 - keep) * -10000.0

    out = fusion_forward(inputs, mask, head_size)
    out = jax.block_until_ready(out)

    # reference check in plain JAX (tolerance loosened for approx reciprocal)
    ref = jax.nn.softmax(inputs / math.sqrt(head_size) + mask, axis=-1)
    assert jnp.allclose(out, ref, atol=2e-3, rtol=2e-3), "mismatch vs reference"

    print("KERNEL_OK")
</pallas_src>

<mosaic_0001>
module attributes {stable_mosaic.version = 11 : i64} {
  func.func @_fusion_kernel(%arg0: i32, %arg1: i32, %arg2: memref<1x512x128xf32, #tpu.memory_space<vmem>>, %arg3: memref<1x1x128xf32, #tpu.memory_space<vmem>>, %arg4: memref<1x512x128xf32, #tpu.memory_space<vmem>>) attributes {dimension_semantics = [#tpu.dimension_semantics<parallel>, #tpu.dimension_semantics<parallel>], iteration_bounds = array<i64: 2, 1>, scalar_prefetch = 0 : i64, scratch_operands = 0 : i64, tpu.core_type = #tpu.core_type<tc>, window_params = [{transform_indices = @transform_0, window_bounds = array<i64: 1, 512, 128>}, {transform_indices = @transform_1, window_bounds = array<i64: 1, 1, 128>}, {transform_indices = @transform_2, window_bounds = array<i64: 1, 512, 128>}]} {
    %c0 = arith.constant 0 : index
    %c0_0 = arith.constant 0 : index
    %c0_1 = arith.constant 0 : index
    %0 = vector.load %arg2[%c0, %c0_0, %c0_1] : memref<1x512x128xf32, #tpu.memory_space<vmem>>, vector<1x512x128xf32>
    %1 = vector.shape_cast %0 : vector<1x512x128xf32> to vector<512x128xf32>
    %cst = arith.constant 0.353553385 : f32
    %2 = vector.broadcast %cst : f32 to vector<512x128xf32>
    %3 = arith.mulf %1, %2 : vector<512x128xf32>
    %c0_2 = arith.constant 0 : index
    %c0_3 = arith.constant 0 : index
    %c0_4 = arith.constant 0 : index
    %4 = vector.load %arg3[%c0_2, %c0_3, %c0_4] : memref<1x1x128xf32, #tpu.memory_space<vmem>>, vector<1x1x128xf32>
    %5 = vector.shape_cast %4 : vector<1x1x128xf32> to vector<1x128xf32>
    %6 = vector.broadcast %5 : vector<1x128xf32> to vector<512x128xf32>
    %7 = arith.addf %3, %6 : vector<512x128xf32>
    %cst_5 = arith.constant dense<0xFF800000> : vector<512xf32>
    %8 = vector.multi_reduction <maximumf>, %7, %cst_5 [1] : vector<512x128xf32> to vector<512xf32>
    %9 = vector.shape_cast %8 : vector<512xf32> to vector<512x1xf32>
    %10 = vector.broadcast %9 : vector<512x1xf32> to vector<512x128xf32>
    %11 = arith.subf %7, %10 : vector<512x128xf32>
    %12 = math.exp %11 : vector<512x128xf32>
    %cst_6 = arith.constant dense<0.000000e+00> : vector<512xf32>
    %13 = vector.multi_reduction <add>, %12, %cst_6 [1] : vector<512x128xf32> to vector<512xf32>
    %14 = vector.shape_cast %13 : vector<512xf32> to vector<512x1xf32>
    %15 = tpu.reciprocal %14 {approx = true} : vector<512x1xf32> -> vector<512x1xf32>
    %16 = vector.broadcast %15 : vector<512x1xf32> to vector<512x128xf32>
    %17 = arith.mulf %12, %16 : vector<512x128xf32>
    %c0_7 = arith.constant 0 : index
    %c0_8 = arith.constant 0 : index
    %c0_9 = arith.constant 0 : index
    %18 = vector.load %arg4[%c0_7, %c0_8, %c0_9] : memref<1x512x128xf32, #tpu.memory_space<vmem>>, vector<1x512x128xf32>
    %19 = vector.shape_cast %18 : vector<1x512x128xf32> to vector<512x128xf32>
    %20 = vector.shape_cast %17 : vector<512x128xf32> to vector<1x512x128xf32>
    tpu.vector_store %arg4[%c0_7, %c0_8, %c0_9], %20 {strides = array<i32>} : memref<1x512x128xf32, #tpu.memory_space<vmem>>, vector<1x512x128xf32>,
    return
  }
  func.func @transform_0(%arg0: i32, %arg1: i32) -> (i32, i32, i32) {
    %c0_i32 = arith.constant 0 : i32
    %c0_i32_0 = arith.constant 0 : i32
    return %arg0, %arg1, %c0_i32 : i32, i32, i32
  }
  func.func @transform_1(%arg0: i32, %arg1: i32) -> (i32, i32, i32) {
    %c0_i32 = arith.constant 0 : i32
    %c0_i32_0 = arith.constant 0 : i32
    %c0_i32_1 = arith.constant 0 : i32
    return %arg0, %c0_i32, %c0_i32_0 : i32, i32, i32
  }
  func.func @transform_2(%arg0: i32, %arg1: i32) -> (i32, i32, i32) {
    %c0_i32 = arith.constant 0 : i32
    %c0_i32_0 = arith.constant 0 : i32
    return %arg0, %arg1, %c0_i32 : i32, i32, i32
  }
}

</mosaic_0001>

<llo_original>
// kernel: tpu_custom_call.1
$region0: #{tpu_custom_call.1}
  #allocation0 [shape = 'u32[]', space=smem, size = 0x4, offset = 0x4, fixed_abs, tag = 'smem constant byte address 0x4 - core index']
  #allocation1 [shape = 'u32[144,128]{1,0:T(1,128)}', space=vmem, size = 0x12000, scoped, tag = 'internal scratch']
  %s0 = inlined_call_operand.hbm [shape: f32[2,512,128], index: 0, kind: input, shape index: {}]
  %s1 = inlined_call_operand.hbm [shape: f32[2,1,128], index: 1, kind: input, shape index: {}]
  %s2 = inlined_call_operand.hbm [shape: f32[2,512,128], index: 2, kind: output, shape index: {}]
  %s3 = sld [smem:[#allocation0]]
  $region49: #{tpu_custom_call.1} parent=0
    _
  %s5 = ssub.s32 1, %s3
  %s6 = scalar_select 0, %s5, %s3
  $region1: #{tpu_custom_call.1} parent=0
    #allocation2 [shape = 'u8[524288]{0}', space=vmem, size = 0x80000, scoped, tag = 'input window, operand 0']
    #allocation3 [shape = 's32[2]{0}', space=sflag, size = 0x8, scoped, tag = 'scoped memory for tpu_custom_call.1']
    #allocation4 [shape = 's32[2]{0}', space=sflag, size = 0x8, scoped, tag = 'scoped memory for tpu_custom_call.1']
    #allocation5 [shape = 'u8[1024]{0}', space=vmem, size = 0x400, scoped, tag = 'input window, operand 1']
    #allocation6 [shape = 's32[2]{0}', space=sflag, size = 0x8, scoped, tag = 'scoped memory for tpu_custom_call.1']
    #allocation7 [shape = 'u8[524288]{0}', space=vmem, size = 0x80000, scoped, tag = 'output window, operand 0']
    %7 = vsyncpa [#allocation3], 0
    %s8 = scalar_lea.sflag [#allocation3], 1
    %9 = vsyncpa %s8, 0
    %10 = vsyncpa [#allocation6], 0
    %s11 = scalar_lea.sflag [#allocation6], 1
    %12 = vsyncpa %s11, 0
    %13 = vsyncpa [#allocation4], 0
    %s14 = scalar_lea.sflag [#allocation4], 1
    %15 = vsyncpa %s14, 0
    loop: start=0, step=1, limit=4
    $region2: #{tpu_custom_call.1} parent=1 // loop_pre_header
      _
    $region3: #{tpu_custom_call.1} parent=1 // loop_header
      %s17 = sphi 0, %s21
      %p18 = scmp.ge.s32.totalorder %s17, 4
      %s24 = sphi 0, %s36
      %s25 = sphi 0, %s32
      %s26 = sphi 0, %s24
      %s27 = sphi 0, %s25
      %s28 = sphi 0, %s26
      %s29 = sphi 0, %s27
      %s41 = sphi 0, %s43
      %s44 = sphi 0, %s41
      %s45 = sphi 0, %s44
      %s61 = sphi 0, %s45
      %s67 = sphi 0, %s69
      %s70 = sphi 0, %s67
      %s71 = sphi 0, %s70
      %s87 = sphi 0, %s71
      %s95 = sphi 0, %s97
      %s98 = sphi 0, %s95
      %s99 = sphi 0, %s98
      %s115 = sphi 0, %s99
    $region4: #{tpu_custom_call.1} parent=1 // loop_header_branch
      %20 = sbr.rel (%p18) target = $region8
    $region5: #{tpu_custom_call.1} parent=1 // loop_body
      %s22 = ssub.s32 %s17, 1
      %s23 = ssub.s32 %s17, 2
      %s30 = sadd.s32 1, %s25
      %p31 = scmp.ge.s32.totalorder %s30, 1
      %s32 = scalar_select %p31, 0, %s30
      %s33 = sadd.s32 1, %s24
      %s34 = scalar_select %p31, %s33, %s24
      %p35 = scmp.ge.s32.totalorder %s34, 2
      %s36 = scalar_select %p35, 0, %s34
      %s37 = ssub.s32 %s24, %s36
      %s38 = ssub.s32 %s25, %s32
      %s39 = sor.u32 %s37, %s38
      %p40 = scmp.eq.s32.totalorder %s39, 0
      %s42 = sadd.s32 %s41, 1
      %s43 = scalar_select %p40, %s41, %s42
      %p46 = pneg %p40
      %p47 = scmp.eq.s32.totalorder %s17, 1
      %p48 = por %p46, %p47
      %p49 = scmp.ne.s32.totalorder %s41, %s44
      %p50 = scmp.eq.s32.totalorder %s17, 0
      %p51 = por %p49, %p50
      %p52 = scmp.ne.s32.totalorder %s41, %s44
      %p53 = scmp.eq.s32.totalorder %s22, 1
      %p54 = por %p52, %p53
      %p55 = scmp.ne.s32.totalorder %s44, %s45
      %p56 = scmp.eq.s32.totalorder %s22, 0
      %p57 = por %p55, %p56
      %p58 = scmp.ne.s32.totalorder %s44, %s45
      %p59 = scmp.eq.s32.totalorder %s23, 1
      %p60 = por %p58, %p59
      %p62 = scmp.ne.s32.totalorder %s45, %s61
      %p63 = scmp.eq.s32.totalorder %s23, 0
      %p64 = por %p62, %p63
      %s65 = ssub.s32 %s24, %s36
      %p66 = scmp.eq.s32.totalorder %s65, 0
      %s68 = sadd.s32 %s67, 1
      %s69 = scalar_select %p66, %s67, %s68
      %p72 = pneg %p66
      %p73 = scmp.eq.s32.totalorder %s17, 1
      %p74 = por %p72, %p73
      %p75 = scmp.ne.s32.totalorder %s67, %s70
      %p76 = scmp.eq.s32.totalorder %s17, 0
      %p77 = por %p75, %p76
      %p78 = scmp.ne.s32.totalorder %s67, %s70
      %p79 = scmp.eq.s32.totalorder %s22, 1
      %p80 = por %p78, %p79
      %p81 = scmp.ne.s32.totalorder %s70, %s71
      %p82 = scmp.eq.s32.totalorder %s22, 0
      %p83 = por %p81, %p82
      %p84 = scmp.ne.s32.totalorder %s70, %s71
      %p85 = scmp.eq.s32.totalorder %s23, 1
      %p86 = por %p84, %p85
      %p88 = scmp.ne.s32.totalorder %s71, %s87
      %p89 = scmp.eq.s32.totalorder %s23, 0
      %p90 = por %p88, %p89
      %s91 = ssub.s32 %s24, %s36
      %s92 = ssub.s32 %s25, %s32
      %s93 = sor.u32 %s91, %s92
      %p94 = scmp.eq.s32.totalorder %s93, 0
      %s96 = sadd.s32 %s95, 1
      %s97 = scalar_select %p94, %s95, %s96
      %p100 = pneg %p94
      %p101 = scmp.eq.s32.totalorder %s17, 1
      %p102 = por %p100, %p101
      %p103 = scmp.ne.s32.totalorder %s95, %s98
      %p104 = scmp.eq.s32.totalorder %s17, 0
      %p105 = por %p103, %p104
      %p106 = scmp.ne.s32.totalorder %s95, %s98
      %p107 = scmp.eq.s32.totalorder %s22, 1
      %p108 = por %p106, %p107
      %p109 = scmp.ne.s32.totalorder %s98, %s99
      %p110 = scmp.eq.s32.totalorder %s22, 0
      %p111 = por %p109, %p110
      %p112 = scmp.ne.s32.totalorder %s98, %s99
      %p113 = scmp.eq.s32.totalorder %s23, 1
      %p114 = por %p112, %p113
      %p116 = scmp.ne.s32.totalorder %s99, %s115
      %p117 = scmp.eq.s32.totalorder %s23, 0
      %p118 = por %p116, %p117
      %p119 = scmp.le.s32.totalorder 1, %s17
      %p120 = scmp.lt.s32.totalorder %s17, 3
      %p121 = pnand %p119, %p120
      %p122 = pneg %p121
      // Predicated region
      $region9: #{tpu_custom_call.1} parent=5 // pred_check
        _
      $region10: #{tpu_custom_call.1} parent=5 // pred_check_branch
        %124 = sbr.rel (%p121) target = $region12
      $region11: #{tpu_custom_call.1} parent=5 // pred_region
        %s125 = ssub.s32 %s17, 1
      $region12: #{tpu_custom_call.1} parent=5 // pred_fallthru
        _
      %p126 = scmp.lt.s32.totalorder %s17, 2
      // Predicated region
      $region13: #{tpu_custom_call.1} parent=5 // pred_check
        %p127 = pneg %p126
      $region14: #{tpu_custom_call.1} parent=5 // pred_check_branch
        %129 = sbr.rel (%p127) target = $region16
      $region15: #{tpu_custom_call.1} parent=5 // pred_region
        // Predicated region
        $region17: #{tpu_custom_call.1} parent=15 // pred_check
          %p130 = pneg %p51
        $region18: #{tpu_custom_call.1} parent=15 // pred_check_branch
          %132 = sbr.rel (%p130) target = $region20
        $region19: #{tpu_custom_call.1} parent=15 // pred_region
          %s133 = sand.u32 %s41, 1
          %s134 = scalar_lea.sflag [#allocation3], %s133
          %s135 = sand.u32 %s41, 1
          %s136 = smul.addr %s135, 512
          %s137 = scalar_lea.vmem [#allocation2], %s136
          %s138 = smul.u32 64, %s25
          %s140 = ssub.s32 8192, 8192
          %141 = vsyncadd %s134, %s140
          %s142 = smul.addr %s24, 64
          %s143 = sadd.s32 %s138, %s142
          %s144 = smul.addr %s143, 128
          %s145 = scalar_lea.hbm %s0, %s144
          %s146 = sshll.u32 %s137, 4
          %s147 = int_to_ptr.vmem [resolvable:$true] %s146
          %152 = dma.hbm_to_vmem [thread:$0]  %s145, 8192, %s147, %s134, 128, 128, 8
        $region20: #{tpu_custom_call.1} parent=15 // pred_fallthru
          _
        // Predicated region
        $region21: #{tpu_custom_call.1} parent=15 // pred_check
          %p153 = pneg %p77
        $region22: #{tpu_custom_call.1} parent=15 // pred_check_branch
          %155 = sbr.rel (%p153) target = $region24
        $region23: #{tpu_custom_call.1} parent=15 // pred_region
          %s156 = sand.u32 %s67, 1
          %s157 = scalar_lea.sflag [#allocation6], %s156
          %s158 = sand.u32 %s67, 1
          %s159 = scalar_lea.vmem [#allocation5], %s158
          %s161 = ssub.s32 16, 16
          %162 = vsyncadd %s157, %s161
          %s163 = smul.addr %s24, 16
          %s164 = scalar_lea.hbm %s1, %s163
          %s166 = sshll.u32 %s159, 4
          %s167 = int_to_ptr.vmem [resolvable:$true] %s166
          %169 = dma.hbm_to_vmem [thread:$0]  %s164, 16, %s167, %s157
        $region24: #{tpu_custom_call.1} parent=15 // pred_fallthru
          _
      $region16: #{tpu_custom_call.1} parent=5 // pred_fallthru
        _
      %p170 = scmp.le.s32.totalorder 1, %s17
      %p171 = scmp.lt.s32.totalorder %s17, 3
      %p172 = pnand %p170, %p171
      %p173 = pneg %p172
      // Predicated region
      $region25: #{tpu_custom_call.1} parent=5 // pred_check
        _
      $region26: #{tpu_custom_call.1} parent=5 // pred_check_branch
        %175 = sbr.rel (%p172) target = $region28
      $region27: #{tpu_custom_call.1} parent=5 // pred_region
        %s176 = ssub.s32 %s17, 1
        %s177 = sand.u32 %s44, 1
        %s178 = scalar_lea.sflag [#allocation3], %s177
        %s179 = sand.u32 %s44, 1
        %s180 = smul.addr %s179, 512
        %s181 = scalar_lea.vmem [#allocation2], %s180
        // Predicated region
        $region29: #{tpu_custom_call.1} parent=27 // pred_check
          %p182 = pneg %p57
        $region30: #{tpu_custom_call.1} parent=27 // pred_check_branch
          %184 = sbr.rel (%p182) target = $region32
        $region31: #{tpu_custom_call.1} parent=27 // pred_region
          %185 = dma.done %s178, 8192
        $region32: #{tpu_custom_call.1} parent=27 // pred_fallthru
          _
        %s186 = sand.u32 %s70, 1
        %s187 = scalar_lea.sflag [#allocation6], %s186
        %s188 = sand.u32 %s70, 1
        %s189 = scalar_lea.vmem [#allocation5], %s188
        // Predicated region
        $region33: #{tpu_custom_call.1} parent=27 // pred_check
          %p190 = pneg %p83
        $region34: #{tpu_custom_call.1} parent=27 // pred_check_branch
          %192 = sbr.rel (%p190) target = $region36
        $region35: #{tpu_custom_call.1} parent=27 // pred_region
          %193 = dma.done %s187, 16
        $region36: #{tpu_custom_call.1} parent=27 // pred_fallthru
          _
        %s194 = sand.u32 %s44, 1
        %s195 = scalar_lea.sflag [#allocation3], %s194
        %s196 = sand.u32 %s44, 1
        %s197 = smul.addr %s196, 512
        %s198 = scalar_lea.vmem [#allocation2], %s197
        %p199 = pneg %p57
        %p200 = pneg %p54
        %s201 = sand.u32 %s70, 1
        %s202 = scalar_lea.sflag [#allocation6], %s201
        %s203 = sand.u32 %s70, 1
        %s204 = scalar_lea.vmem [#allocation5], %s203
        %p205 = pneg %p83
        %p206 = pneg %p80
        %p207 = pneg %p111
        %p208 = pneg %p108
        %s209 = sand.u32 %s98, 1
        %s210 = scalar_lea.sflag [#allocation4], %s209
        %s211 = sand.u32 %s98, 1
        %s212 = smul.addr %s211, 512
        %s213 = scalar_lea.vmem [#allocation7], %s212
        %s214 = smul.u32 64, %s27
        %s215 = smul.u32 64, %s27
        %v216 = vld [vmem:[%s181] sm:$0xff]
        %v217 = vld [vmem:[%s181 + $0x8] sm:$0xff]
        %v218 = vld [vmem:[%s181 + $0x10] sm:$0xff]
        %v219 = vld [vmem:[%s181 + $0x18] sm:$0xff]
        %v220 = vld [vmem:[%s181 + $0x20] sm:$0xff]
        %v221 = vld [vmem:[%s181 + $0x28] sm:$0xff]
        %v222 = vld [vmem:[%s181 + $0x30] sm:$0xff]
        %v223 = vld [vmem:[%s181 + $0x38] sm:$0xff]
        %v224 = vld [vmem:[%s181 + $0x40] sm:$0xff]
        %v225 = vld [vmem:[%s181 + $0x48] sm:$0xff]
        %v226 = vld [vmem:[%s181 + $0x50] sm:$0xff]
        %v227 = vld [vmem:[%s181 + $0x58] sm:$0xff]
        %v228 = vld [vmem:[%s181 + $0x60] sm:$0xff]
        %v229 = vld [vmem:[%s181 + $0x68] sm:$0xff]
        %v230 = vld [vmem:[%s181 + $0x70] sm:$0xff]
        %v231 = vld [vmem:[%s181 + $0x78] sm:$0xff]
        %v232 = vld [vmem:[%s181 + $0x80] sm:$0xff]
        %v233 = vld [vmem:[%s181 + $0x88] sm:$0xff]
        %v234 = vld [vmem:[%s181 + $0x90] sm:$0xff]
        %v235 = vld [vmem:[%s181 + $0x98] sm:$0xff]
        %v236 = vld [vmem:[%s181 + $0xa0] sm:$0xff]
        %v237 = vld [vmem:[%s181 + $0xa8] sm:$0xff]
        %v238 = vld [vmem:[%s181 + $0xb0] sm:$0xff]
        %v239 = vld [vmem:[%s181 + $0xb8] sm:$0xff]
        %v240 = vld [vmem:[%s181 + $0xc0] sm:$0xff]
        %v241 = vld [vmem:[%s181 + $0xc8] sm:$0xff]
        %v242 = vld [vmem:[%s181 + $0xd0] sm:$0xff]
        %v243 = vld [vmem:[%s181 + $0xd8] sm:$0xff]
        %v244 = vld [vmem:[%s181 + $0xe0] sm:$0xff]
        %v245 = vld [vmem:[%s181 + $0xe8] sm:$0xff]
        %v246 = vld [vmem:[%s181 + $0xf0] sm:$0xff]
        %v247 = vld [vmem:[%s181 + $0xf8] sm:$0xff]
        %v248 = vld [vmem:[%s181 + $0x100] sm:$0xff]
        %v249 = vld [vmem:[%s181 + $0x108] sm:$0xff]
        %v250 = vld [vmem:[%s181 + $0x110] sm:$0xff]
        %v251 = vld [vmem:[%s181 + $0x118] sm:$0xff]
        %v252 = vld [vmem:[%s181 + $0x120] sm:$0xff]
        %v253 = vld [vmem:[%s181 + $0x128] sm:$0xff]
        %v254 = vld [vmem:[%s181 + $0x130] sm:$0xff]
        %v255 = vld [vmem:[%s181 + $0x138] sm:$0xff]
        %v256 = vld [vmem:[%s181 + $0x140] sm:$0xff]
        %v257 = vld [vmem:[%s181 + $0x148] sm:$0xff]
        %v258 = vld [vmem:[%s181 + $0x150] sm:$0xff]
        %v259 = vld [vmem:[%s181 + $0x158] sm:$0xff]
        %v260 = vld [vmem:[%s181 + $0x160] sm:$0xff]
        %v261 = vld [vmem:[%s181 + $0x168] sm:$0xff]
        %v262 = vld [vmem:[%s181 + $0x170] sm:$0xff]
        %v263 = vld [vmem:[%s181 + $0x178] sm:$0xff]
        %v264 = vld [vmem:[%s181 + $0x180] sm:$0xff]
        %v265 = vld [vmem:[%s181 + $0x188] sm:$0xff]
        %v266 = vld [vmem:[%s181 + $0x190] sm:$0xff]
        %v267 = vld [vmem:[%s181 + $0x198] sm:$0xff]
        %v268 = vld [vmem:[%s181 + $0x1a0] sm:$0xff]
        %v269 = vld [vmem:[%s181 + $0x1a8] sm:$0xff]
        %v270 = vld [vmem:[%s181 + $0x1b0] sm:$0xff]
        %v271 = vld [vmem:[%s181 + $0x1b8] sm:$0xff]
        %v272 = vld [vmem:[%s181 + $0x1c0] sm:$0xff]
        %v273 = vld [vmem:[%s181 + $0x1c8] sm:$0xff]
        %v274 = vld [vmem:[%s181 + $0x1d0] sm:$0xff]
        %v275 = vld [vmem:[%s181 + $0x1d8] sm:$0xff]
        %v276 = vld [vmem:[%s181 + $0x1e0] sm:$0xff]
        %v277 = vld [vmem:[%s181 + $0x1e8] sm:$0xff]
        %v278 = vld [vmem:[%s181 + $0x1f0] sm:$0xff]
        %v279 = vld [vmem:[%s181 + $0x1f8] sm:$0xff]
        %v280 = vmul.f32 %v216, 0.35355338
        %v281 = vmul.f32 %v217, 0.35355338
        %v282 = vmul.f32 %v218, 0.35355338
        %v283 = vmul.f32 %v219, 0.35355338
        %v284 = vmul.f32 %v220, 0.35355338
        %v285 = vmul.f32 %v221, 0.35355338
        %v286 = vmul.f32 %v222, 0.35355338
        %v287 = vmul.f32 %v223, 0.35355338
        %v288 = vmul.f32 %v224, 0.35355338
        %v289 = vmul.f32 %v225, 0.35355338
        %v290 = vmul.f32 %v226, 0.35355338
        %v291 = vmul.f32 %v227, 0.35355338
        %v292 = vmul.f32 %v228, 0.35355338
        %v293 = vmul.f32 %v229, 0.35355338
        %v294 = vmul.f32 %v230, 0.35355338
        %v295 = vmul.f32 %v231, 0.35355338
        %v296 = vmul.f32 %v232, 0.35355338
        %v297 = vmul.f32 %v233, 0.35355338
        %v298 = vmul.f32 %v234, 0.35355338
        %v299 = vmul.f32 %v235, 0.35355338
        %v300 = vmul.f32 %v236, 0.35355338
        %v301 = vmul.f32 %v237, 0.35355338
        %v302 = vmul.f32 %v238, 0.35355338
        %v303 = vmul.f32 %v239, 0.35355338
        %v304 = vmul.f32 %v240, 0.35355338
        %v305 = vmul.f32 %v241, 0.35355338
        %v306 = vmul.f32 %v242, 0.35355338
        %v307 = vmul.f32 %v243, 0.35355338
        %v308 = vmul.f32 %v244, 0.35355338
        %v309 = vmul.f32 %v245, 0.35355338
        %v310 = vmul.f32 %v246, 0.35355338
        %v311 = vmul.f32 %v247, 0.35355338
        %v312 = vmul.f32 %v248, 0.35355338
        %v313 = vmul.f32 %v249, 0.35355338
        %v314 = vmul.f32 %v250, 0.35355338
        %v315 = vmul.f32 %v251, 0.35355338
        %v316 = vmul.f32 %v252, 0.35355338
        %v317 = vmul.f32 %v253, 0.35355338
        %v318 = vmul.f32 %v254, 0.35355338
        %v319 = vmul.f32 %v255, 0.35355338
        %v320 = vmul.f32 %v256, 0.35355338
        %v321 = vmul.f32 %v257, 0.35355338
        %v322 = vmul.f32 %v258, 0.35355338
        %v323 = vmul.f32 %v259, 0.35355338
        %v324 = vmul.f32 %v260, 0.35355338
        %v325 = vmul.f32 %v261, 0.35355338
        %v326 = vmul.f32 %v262, 0.35355338
        %v327 = vmul.f32 %v263, 0.35355338
        %v328 = vmul.f32 %v264, 0.35355338
        %v329 = vmul.f32 %v265, 0.35355338
        %v330 = vmul.f32 %v266, 0.35355338
        %v331 = vmul.f32 %v267, 0.35355338
        %v332 = vmul.f32 %v268, 0.35355338
        %v333 = vmul.f32 %v269, 0.35355338
        %v334 = vmul.f32 %v270, 0.35355338
        %v335 = vmul.f32 %v271, 0.35355338
        %v336 = vmul.f32 %v272, 0.35355338
        %v337 = vmul.f32 %v273, 0.35355338
        %v338 = vmul.f32 %v274, 0.35355338
        %v339 = vmul.f32 %v275, 0.35355338
        %v340 = vmul.f32 %v276, 0.35355338
        %v341 = vmul.f32 %v277, 0.35355338
        %v342 = vmul.f32 %v278, 0.35355338
        %v343 = vmul.f32 %v279, 0.35355338
        %v344 = vld [vmem:[%s189] sm:$0x1]
        %v346 = vlaneseq
        %v347 = vshrl.u32 %v346, 7
        %v348 = vsub.s32 0, %v347
        %v349 = vrot.slane %v344, %v348
        %v351 = vadd.f32 %v280, %v349
        %v352 = vadd.f32 %v281, %v349
        %v353 = vadd.f32 %v282, %v349
        %v354 = vadd.f32 %v283, %v349
        %v355 = vadd.f32 %v284, %v349
        %v356 = vadd.f32 %v285, %v349
        %v357 = vadd.f32 %v286, %v349
        %v358 = vadd.f32 %v287, %v349
        %v359 = vadd.f32 %v288, %v349
        %v360 = vadd.f32 %v289, %v349
        %v361 = vadd.f32 %v290, %v349
        %v362 = vadd.f32 %v291, %v349
        %v363 = vadd.f32 %v292, %v349
        %v364 = vadd.f32 %v293, %v349
        %v365 = vadd.f32 %v294, %v349
        %v366 = vadd.f32 %v295, %v349
        %v367 = vadd.f32 %v296, %v349
        %v368 = vadd.f32 %v297, %v349
        %v369 = vadd.f32 %v298, %v349
        %v370 = vadd.f32 %v299, %v349
        %v371 = vadd.f32 %v300, %v349
        %v372 = vadd.f32 %v301, %v349
        %v373 = vadd.f32 %v302, %v349
        %v374 = vadd.f32 %v303, %v349
        %v375 = vadd.f32 %v304, %v349
        %v376 = vadd.f32 %v305, %v349
        %v377 = vadd.f32 %v306, %v349
        %v378 = vadd.f32 %v307, %v349
        %v379 = vadd.f32 %v308, %v349
        %v380 = vadd.f32 %v309, %v349
        %v381 = vadd.f32 %v310, %v349
        %v382 = vadd.f32 %v311, %v349
        %v383 = vadd.f32 %v312, %v349
        %v384 = vadd.f32 %v313, %v349
        %v385 = vadd.f32 %v314, %v349
        %v386 = vadd.f32 %v315, %v349
        %v387 = vadd.f32 %v316, %v349
        %v388 = vadd.f32 %v317, %v349
        %v389 = vadd.f32 %v318, %v349
        %v390 = vadd.f32 %v319, %v349
        %v391 = vadd.f32 %v320, %v349
        %v392 = vadd.f32 %v321, %v349
        %v393 = vadd.f32 %v322, %v349
        %v394 = vadd.f32 %v323, %v349
        %v395 = vadd.f32 %v324, %v349
        %v396 = vadd.f32 %v325, %v349
        %v397 = vadd.f32 %v326, %v349
        %v398 = vadd.f32 %v327, %v349
        %v399 = vadd.f32 %v328, %v349
        %v400 = vadd.f32 %v329, %v349
        %v401 = vadd.f32 %v330, %v349
        %v402 = vadd.f32 %v331, %v349
        %v403 = vadd.f32 %v332, %v349
        %v404 = vadd.f32 %v333, %v349
        %v405 = vadd.f32 %v334, %v349
        %v406 = vadd.f32 %v335, %v349
        %v407 = vadd.f32 %v336, %v349
        %v408 = vadd.f32 %v337, %v349
        %v409 = vadd.f32 %v338, %v349
        %v410 = vadd.f32 %v339, %v349
        %v411 = vadd.f32 %v340, %v349
        %v412 = vadd.f32 %v341, %v349
        %v413 = vadd.f32 %v342, %v349
        %v414 = vadd.f32 %v343, %v349
        %415 = vmax.xlane.f32.xlu0 %v351
        %v416 = vpop.xlane.xlu0 %415
        %417 = vmax.xlane.f32.xlu0 %v352
        %v418 = vpop.xlane.xlu0 %417
        %419 = vmax.xlane.f32.xlu0 %v353
        %v420 = vpop.xlane.xlu0 %419
        %421 = vmax.xlane.f32.xlu0 %v354
        %v422 = vpop.xlane.xlu0 %421
        %423 = vmax.xlane.f32.xlu0 %v355
        %v424 = vpop.xlane.xlu0 %423
        %425 = vmax.xlane.f32.xlu0 %v356
        %v426 = vpop.xlane.xlu0 %425
        %427 = vmax.xlane.f32.xlu0 %v357
        %v428 = vpop.xlane.xlu0 %427
        %429 = vmax.xlane.f32.xlu0 %v358
        %v430 = vpop.xlane.xlu0 %429
        %431 = vmax.xlane.f32.xlu0 %v359
        %v432 = vpop.xlane.xlu0 %431
        %433 = vmax.xlane.f32.xlu0 %v360
        %v434 = vpop.xlane.xlu0 %433
        %435 = vmax.xlane.f32.xlu0 %v361
        %v436 = vpop.xlane.xlu0 %435
        %437 = vmax.xlane.f32.xlu0 %v362
        %v438 = vpop.xlane.xlu0 %437
        %439 = vmax.xlane.f32.xlu0 %v363
        %v440 = vpop.xlane.xlu0 %439
        %441 = vmax.xlane.f32.xlu0 %v364
        %v442 = vpop.xlane.xlu0 %441
        %443 = vmax.xlane.f32.xlu0 %v365
        %v444 = vpop.xlane.xlu0 %443
        %445 = vmax.xlane.f32.xlu0 %v366
        %v446 = vpop.xlane.xlu0 %445
        %447 = vmax.xlane.f32.xlu0 %v367
        %v448 = vpop.xlane.xlu0 %447
        %449 = vmax.xlane.f32.xlu0 %v368
        %v450 = vpop.xlane.xlu0 %449
        %451 = vmax.xlane.f32.xlu0 %v369
        %v452 = vpop.xlane.xlu0 %451
        %453 = vmax.xlane.f32.xlu0 %v370
        %v454 = vpop.xlane.xlu0 %453
        %455 = vmax.xlane.f32.xlu0 %v371
        %v456 = vpop.xlane.xlu0 %455
        %457 = vmax.xlane.f32.xlu0 %v372
        %v458 = vpop.xlane.xlu0 %457
        %459 = vmax.xlane.f32.xlu0 %v373
        %v460 = vpop.xlane.xlu0 %459
        %461 = vmax.xlane.f32.xlu0 %v374
        %v462 = vpop.xlane.xlu0 %461
        %463 = vmax.xlane.f32.xlu0 %v375
        %v464 = vpop.xlane.xlu0 %463
        %465 = vmax.xlane.f32.xlu0 %v376
        %v466 = vpop.xlane.xlu0 %465
        %467 = vmax.xlane.f32.xlu0 %v377
        %v468 = vpop.xlane.xlu0 %467
        %469 = vmax.xlane.f32.xlu0 %v378
        %v470 = vpop.xlane.xlu0 %469
        %471 = vmax.xlane.f32.xlu0 %v379
        %v472 = vpop.xlane.xlu0 %471
        %473 = vmax.xlane.f32.xlu0 %v380
        %v474 = vpop.xlane.xlu0 %473
        %475 = vmax.xlane.f32.xlu0 %v381
        %v476 = vpop.xlane.xlu0 %475
        %477 = vmax.xlane.f32.xlu0 %v382
        %v478 = vpop.xlane.xlu0 %477
        %479 = vmax.xlane.f32.xlu0 %v383
        %v480 = vpop.xlane.xlu0 %479
        %481 = vmax.xlane.f32.xlu0 %v384
        %v482 = vpop.xlane.xlu0 %481
        %483 = vmax.xlane.f32.xlu0 %v385
        %v484 = vpop.xlane.xlu0 %483
        %485 = vmax.xlane.f32.xlu0 %v386
        %v486 = vpop.xlane.xlu0 %485
        %487 = vmax.xlane.f32.xlu0 %v387
        %v488 = vpop.xlane.xlu0 %487
        %489 = vmax.xlane.f32.xlu0 %v388
        %v490 = vpop.xlane.xlu0 %489
        %491 = vmax.xlane.f32.xlu0 %v389
        %v492 = vpop.xlane.xlu0 %491
        %493 = vmax.xlane.f32.xlu0 %v390
        %v494 = vpop.xlane.xlu0 %493
        %495 = vmax.xlane.f32.xlu0 %v391
        %v496 = vpop.xlane.xlu0 %495
        %497 = vmax.xlane.f32.xlu0 %v392
        %v498 = vpop.xlane.xlu0 %497
        %499 = vmax.xlane.f32.xlu0 %v393
        %v500 = vpop.xlane.xlu0 %499
        %501 = vmax.xlane.f32.xlu0 %v394
        %v502 = vpop.xlane.xlu0 %501
        %503 = vmax.xlane.f32.xlu0 %v395
        %v504 = vpop.xlane.xlu0 %503
        %505 = vmax.xlane.f32.xlu0 %v396
        %v506 = vpop.xlane.xlu0 %505
        %507 = vmax.xlane.f32.xlu0 %v397
        %v508 = vpop.xlane.xlu0 %507
        %509 = vmax.xlane.f32.xlu0 %v398
        %v510 = vpop.xlane.xlu0 %509
        %511 = vmax.xlane.f32.xlu0 %v399
        %v512 = vpop.xlane.xlu0 %511
        %513 = vmax.xlane.f32.xlu0 %v400
        %v514 = vpop.xlane.xlu0 %513
        %515 = vmax.xlane.f32.xlu0 %v401
        %v516 = vpop.xlane.xlu0 %515
        %517 = vmax.xlane.f32.xlu0 %v402
        %v518 = vpop.xlane.xlu0 %517
        %519 = vmax.xlane.f32.xlu0 %v403
        %v520 = vpop.xlane.xlu0 %519
        %521 = vmax.xlane.f32.xlu0 %v404
        %v522 = vpop.xlane.xlu0 %521
        %523 = vmax.xlane.f32.xlu0 %v405
        %v524 = vpop.xlane.xlu0 %523
        %525 = vmax.xlane.f32.xlu0 %v406
        %v526 = vpop.xlane.xlu0 %525
        %527 = vmax.xlane.f32.xlu0 %v407
        %v528 = vpop.xlane.xlu0 %527
        %529 = vmax.xlane.f32.xlu0 %v408
        %v530 = vpop.xlane.xlu0 %529
        %531 = vmax.xlane.f32.xlu0 %v409
        %v532 = vpop.xlane.xlu0 %531
        %533 = vmax.xlane.f32.xlu0 %v410
        %v534 = vpop.xlane.xlu0 %533
        %535 = vmax.xlane.f32.xlu0 %v411
        %v536 = vpop.xlane.xlu0 %535
        %537 = vmax.xlane.f32.xlu0 %v412
        %v538 = vpop.xlane.xlu0 %537
        %539 = vmax.xlane.f32.xlu0 %v413
        %v540 = vpop.xlane.xlu0 %539
        %541 = vmax.xlane.f32.xlu0 %v414
        %v542 = vpop.xlane.xlu0 %541
        %v543 = vsub.f32 %v351, %v416
        %v544 = vsub.f32 %v352, %v418
        %v545 = vsub.f32 %v353, %v420
        %v546 = vsub.f32 %v354, %v422
        %v547 = vsub.f32 %v355, %v424
        %v548 = vsub.f32 %v356, %v426
        %v549 = vsub.f32 %v357, %v428
        %v550 = vsub.f32 %v358, %v430
        %v551 = vsub.f32 %v359, %v432
        %v552 = vsub.f32 %v360, %v434
        %v553 = vsub.f32 %v361, %v436
        %v554 = vsub.f32 %v362, %v438
        %v555 = vsub.f32 %v363, %v440
        %v556 = vsub.f32 %v364, %v442
        %v557 = vsub.f32 %v365, %v444
        %v558 = vsub.f32 %v366, %v446
        %v559 = vsub.f32 %v367, %v448
        %v560 = vsub.f32 %v368, %v450
        %v561 = vsub.f32 %v369, %v452
        %v562 = vsub.f32 %v370, %v454
        %v563 = vsub.f32 %v371, %v456
        %v564 = vsub.f32 %v372, %v458
        %v565 = vsub.f32 %v373, %v460
        %v566 = vsub.f32 %v374, %v462
        %v567 = vsub.f32 %v375, %v464
        %v568 = vsub.f32 %v376, %v466
        %v569 = vsub.f32 %v377, %v468
        %v570 = vsub.f32 %v378, %v470
        %v571 = vsub.f32 %v379, %v472
        %v572 = vsub.f32 %v380, %v474
        %v573 = vsub.f32 %v381, %v476
        %v574 = vsub.f32 %v382, %v478
        %v575 = vsub.f32 %v383, %v480
        %v576 = vsub.f32 %v384, %v482
        %v577 = vsub.f32 %v385, %v484
        %v578 = vsub.f32 %v386, %v486
        %v579 = vsub.f32 %v387, %v488
        %v580 = vsub.f32 %v388, %v490
        %v581 = vsub.f32 %v389, %v492
        %v582 = vsub.f32 %v390, %v494
        %v583 = vsub.f32 %v391, %v496
        %v584 = vsub.f32 %v392, %v498
        %v585 = vsub.f32 %v393, %v500
        %v586 = vsub.f32 %v394, %v502
        %v587 = vsub.f32 %v395, %v504
        %v588 = vsub.f32 %v396, %v506
        %v589 = vsub.f32 %v397, %v508
        %v590 = vsub.f32 %v398, %v510
        %v591 = vsub.f32 %v399, %v512
        %v592 = vsub.f32 %v400, %v514
        %v593 = vsub.f32 %v401, %v516
        %v594 = vsub.f32 %v402, %v518
        %v595 = vsub.f32 %v403, %v520
        %v596 = vsub.f32 %v404, %v522
        %v597 = vsub.f32 %v405, %v524
        %v598 = vsub.f32 %v406, %v526
        %v599 = vsub.f32 %v407, %v528
        %v600 = vsub.f32 %v408, %v530
        %v601 = vsub.f32 %v409, %v532
        %v602 = vsub.f32 %v410, %v534
        %v603 = vsub.f32 %v411, %v536
        %v604 = vsub.f32 %v412, %v538
        %v605 = vsub.f32 %v413, %v540
        %v606 = vsub.f32 %v414, %v542
        %v607 = vmul.f32 %v543, 1.442695
        %v608 = vpow.pop %v607
        %v609 = vmul.f32 %v544, 1.442695
        %v610 = vpow.pop %v609
        %v611 = vmul.f32 %v545, 1.442695
        %v612 = vpow.pop %v611
        %v613 = vmul.f32 %v546, 1.442695
        %v614 = vpow.pop %v613
        %v615 = vmul.f32 %v547, 1.442695
        %v616 = vpow.pop %v615
        %v617 = vmul.f32 %v548, 1.442695
        %v618 = vpow.pop %v617
        %v619 = vmul.f32 %v549, 1.442695
        %v620 = vpow.pop %v619
        %v621 = vmul.f32 %v550, 1.442695
        %v622 = vpow.pop %v621
        %v623 = vmul.f32 %v551, 1.442695
        %v624 = vpow.pop %v623
        %v625 = vmul.f32 %v552, 1.442695
        %v626 = vpow.pop %v625
        %v627 = vmul.f32 %v553, 1.442695
        %v628 = vpow.pop %v627
        %v629 = vmul.f32 %v554, 1.442695
        %v630 = vpow.pop %v629
        %v631 = vmul.f32 %v555, 1.442695
        %v632 = vpow.pop %v631
        %v633 = vmul.f32 %v556, 1.442695
        %v634 = vpow.pop %v633
        %v635 = vmul.f32 %v557, 1.442695
        %v636 = vpow.pop %v635
        %v637 = vmul.f32 %v558, 1.442695
        %v638 = vpow.pop %v637
        %v639 = vmul.f32 %v559, 1.442695
        %v640 = vpow.pop %v639
        %v641 = vmul.f32 %v560, 1.442695
        %v642 = vpow.pop %v641
        %v643 = vmul.f32 %v561, 1.442695
        %v644 = vpow.pop %v643
        %v645 = vmul.f32 %v562, 1.442695
        %v646 = vpow.pop %v645
        %v647 = vmul.f32 %v563, 1.442695
        %v648 = vpow.pop %v647
        %v649 = vmul.f32 %v564, 1.442695
        %v650 = vpow.pop %v649
        %v651 = vmul.f32 %v565, 1.442695
        %v652 = vpow.pop %v651
        %v653 = vmul.f32 %v566, 1.442695
        %v654 = vpow.pop %v653
        %v655 = vmul.f32 %v567, 1.442695
        %v656 = vpow.pop %v655
        %v657 = vmul.f32 %v568, 1.442695
        %v658 = vpow.pop %v657
        %v659 = vmul.f32 %v569, 1.442695
        %v660 = vpow.pop %v659
        %v661 = vmul.f32 %v570, 1.442695
        %v662 = vpow.pop %v661
        %v663 = vmul.f32 %v571, 1.442695
        %v664 = vpow.pop %v663
        %v665 = vmul.f32 %v572, 1.442695
        %v666 = vpow.pop %v665
        %v667 = vmul.f32 %v573, 1.442695
        %v668 = vpow.pop %v667
        %v669 = vmul.f32 %v574, 1.442695
        %v670 = vpow.pop %v669
        %v671 = vmul.f32 %v575, 1.442695
        %v672 = vpow.pop %v671
        %v673 = vmul.f32 %v576, 1.442695
        %v674 = vpow.pop %v673
        %v675 = vmul.f32 %v577, 1.442695
        %v676 = vpow.pop %v675
        %v677 = vmul.f32 %v578, 1.442695
        %v678 = vpow.pop %v677
        %v679 = vmul.f32 %v579, 1.442695
        %v680 = vpow.pop %v679
        %v681 = vmul.f32 %v580, 1.442695
        %v682 = vpow.pop %v681
        %v683 = vmul.f32 %v581, 1.442695
        %v684 = vpow.pop %v683
        %v685 = vmul.f32 %v582, 1.442695
        %v686 = vpow.pop %v685
        %v687 = vmul.f32 %v583, 1.442695
        %v688 = vpow.pop %v687
        %v689 = vmul.f32 %v584, 1.442695
        %v690 = vpow.pop %v689
        %v691 = vmul.f32 %v585, 1.442695
        %v692 = vpow.pop %v691
        %v693 = vmul.f32 %v586, 1.442695
        %v694 = vpow.pop %v693
        %v695 = vmul.f32 %v587, 1.442695
        %v696 = vpow.pop %v695
        %v697 = vmul.f32 %v588, 1.442695
        %v698 = vpow.pop %v697
        %v699 = vmul.f32 %v589, 1.442695
        %v700 = vpow.pop %v699
        %v701 = vmul.f32 %v590, 1.442695
        %v702 = vpow.pop %v701
        %v703 = vmul.f32 %v591, 1.442695
        %v704 = vpow.pop %v703
        %v705 = vmul.f32 %v592, 1.442695
        %v706 = vpow.pop %v705
        %v707 = vmul.f32 %v593, 1.442695
        %v708 = vpow.pop %v707
        %v709 = vmul.f32 %v594, 1.442695
        %v710 = vpow.pop %v709
        %v711 = vmul.f32 %v595, 1.442695
        %v712 = vpow.pop %v711
        %v713 = vmul.f32 %v596, 1.442695
        %v714 = vpow.pop %v713
        %v715 = vmul.f32 %v597, 1.442695
        %v716 = vpow.pop %v715
        %v717 = vmul.f32 %v598, 1.442695
        %v718 = vpow.pop %v717
        %v719 = vmul.f32 %v599, 1.442695
        %v720 = vpow.pop %v719
        %v721 = vmul.f32 %v600, 1.442695
        %v722 = vpow.pop %v721
        %v723 = vmul.f32 %v601, 1.442695
        %v724 = vpow.pop %v723
        %v725 = vmul.f32 %v602, 1.442695
        %v726 = vpow.pop %v725
        %v727 = vmul.f32 %v603, 1.442695
        %v728 = vpow.pop %v727
        %v729 = vmul.f32 %v604, 1.442695
        %v730 = vpow.pop %v729
        %v731 = vmul.f32 %v605, 1.442695
        %v732 = vpow.pop %v731
        %v733 = vmul.f32 %v606, 1.442695
        %v734 = vpow.pop %v733
        %735 = vadd.xlane.f32.xlu0 %v608
        %v736 = vpop.xlane.xlu0 %735
        %737 = vadd.xlane.f32.xlu0 %v610
        %v738 = vpop.xlane.xlu0 %737
        %739 = vadd.xlane.f32.xlu0 %v612
        %v740 = vpop.xlane.xlu0 %739
        %741 = vadd.xlane.f32.xlu0 %v614
        %v742 = vpop.xlane.xlu0 %741
        %743 = vadd.xlane.f32.xlu0 %v616
        %v744 = vpop.xlane.xlu0 %743
        %745 = vadd.xlane.f32.xlu0 %v618
        %v746 = vpop.xlane.xlu0 %745
        %747 = vadd.xlane.f32.xlu0 %v620
        %v748 = vpop.xlane.xlu0 %747
        %749 = vadd.xlane.f32.xlu0 %v622
        %v750 = vpop.xlane.xlu0 %749
        %751 = vadd.xlane.f32.xlu0 %v624
        %v752 = vpop.xlane.xlu0 %751
        %753 = vadd.xlane.f32.xlu0 %v626
        %v754 = vpop.xlane.xlu0 %753
        %755 = vadd.xlane.f32.xlu0 %v628
        %v756 = vpop.xlane.xlu0 %755
        %757 = vadd.xlane.f32.xlu0 %v630
        %v758 = vpop.xlane.xlu0 %757
        %759 = vadd.xlane.f32.xlu0 %v632
        %v760 = vpop.xlane.xlu0 %759
        %761 = vadd.xlane.f32.xlu0 %v634
        %v762 = vpop.xlane.xlu0 %761
        %763 = vadd.xlane.f32.xlu0 %v636
        %v764 = vpop.xlane.xlu0 %763
        %765 = vadd.xlane.f32.xlu0 %v638
        %v766 = vpop.xlane.xlu0 %765
        %767 = vadd.xlane.f32.xlu0 %v640
        %v768 = vpop.xlane.xlu0 %767
        %769 = vadd.xlane.f32.xlu0 %v642
        %v770 = vpop.xlane.xlu0 %769
        %771 = vadd.xlane.f32.xlu0 %v644
        %v772 = vpop.xlane.xlu0 %771
        %773 = vadd.xlane.f32.xlu0 %v646
        %v774 = vpop.xlane.xlu0 %773
        %775 = vadd.xlane.f32.xlu0 %v648
        %v776 = vpop.xlane.xlu0 %775
        %777 = vadd.xlane.f32.xlu0 %v650
        %v778 = vpop.xlane.xlu0 %777
        %779 = vadd.xlane.f32.xlu0 %v652
        %v780 = vpop.xlane.xlu0 %779
        %781 = vadd.xlane.f32.xlu0 %v654
        %v782 = vpop.xlane.xlu0 %781
        %783 = vadd.xlane.f32.xlu0 %v656
        %v784 = vpop.xlane.xlu0 %783
        %785 = vadd.xlane.f32.xlu0 %v658
        %v786 = vpop.xlane.xlu0 %785
        %787 = vadd.xlane.f32.xlu0 %v660
        %v788 = vpop.xlane.xlu0 %787
        %789 = vadd.xlane.f32.xlu0 %v662
        %v790 = vpop.xlane.xlu0 %789
        %791 = vadd.xlane.f32.xlu0 %v664
        %v792 = vpop.xlane.xlu0 %791
        %793 = vadd.xlane.f32.xlu0 %v666
        %v794 = vpop.xlane.xlu0 %793
        %795 = vadd.xlane.f32.xlu0 %v668
        %v796 = vpop.xlane.xlu0 %795
        %797 = vadd.xlane.f32.xlu0 %v670
        %v798 = vpop.xlane.xlu0 %797
        %799 = vadd.xlane.f32.xlu0 %v672
        %v800 = vpop.xlane.xlu0 %799
        %801 = vadd.xlane.f32.xlu0 %v674
        %v802 = vpop.xlane.xlu0 %801
        %803 = vadd.xlane.f32.xlu0 %v676
        %v804 = vpop.xlane.xlu0 %803
        %805 = vadd.xlane.f32.xlu0 %v678
        %v806 = vpop.xlane.xlu0 %805
        %807 = vadd.xlane.f32.xlu0 %v680
        %v808 = vpop.xlane.xlu0 %807
        %809 = vadd.xlane.f32.xlu0 %v682
        %v810 = vpop.xlane.xlu0 %809
        %811 = vadd.xlane.f32.xlu0 %v684
        %v812 = vpop.xlane.xlu0 %811
        %813 = vadd.xlane.f32.xlu0 %v686
        %v814 = vpop.xlane.xlu0 %813
        %815 = vadd.xlane.f32.xlu0 %v688
        %v816 = vpop.xlane.xlu0 %815
        %817 = vadd.xlane.f32.xlu0 %v690
        %v818 = vpop.xlane.xlu0 %817
        %819 = vadd.xlane.f32.xlu0 %v692
        %v820 = vpop.xlane.xlu0 %819
        %821 = vadd.xlane.f32.xlu0 %v694
        %v822 = vpop.xlane.xlu0 %821
        %823 = vadd.xlane.f32.xlu0 %v696
        %v824 = vpop.xlane.xlu0 %823
        %825 = vadd.xlane.f32.xlu0 %v698
        %v826 = vpop.xlane.xlu0 %825
        %827 = vadd.xlane.f32.xlu0 %v700
        %v828 = vpop.xlane.xlu0 %827
        %829 = vadd.xlane.f32.xlu0 %v702
        %v830 = vpop.xlane.xlu0 %829
        %831 = vadd.xlane.f32.xlu0 %v704
        %v832 = vpop.xlane.xlu0 %831
        %833 = vadd.xlane.f32.xlu0 %v706
        %v834 = vpop.xlane.xlu0 %833
        %835 = vadd.xlane.f32.xlu0 %v708
        %v836 = vpop.xlane.xlu0 %835
        %837 = vadd.xlane.f32.xlu0 %v710
        %v838 = vpop.xlane.xlu0 %837
        %839 = vadd.xlane.f32.xlu0 %v712
        %v840 = vpop.xlane.xlu0 %839
        %841 = vadd.xlane.f32.xlu0 %v714
        %v842 = vpop.xlane.xlu0 %841
        %843 = vadd.xlane.f32.xlu0 %v716
        %v844 = vpop.xlane.xlu0 %843
        %845 = vadd.xlane.f32.xlu0 %v718
        %v846 = vpop.xlane.xlu0 %845
        %847 = vadd.xlane.f32.xlu0 %v720
        %v848 = vpop.xlane.xlu0 %847
        %849 = vadd.xlane.f32.xlu0 %v722
        %v850 = vpop.xlane.xlu0 %849
        %851 = vadd.xlane.f32.xlu0 %v724
        %v852 = vpop.xlane.xlu0 %851
        %853 = vadd.xlane.f32.xlu0 %v726
        %v854 = vpop.xlane.xlu0 %853
        %855 = vadd.xlane.f32.xlu0 %v728
        %v856 = vpop.xlane.xlu0 %855
        %857 = vadd.xlane.f32.xlu0 %v730
        %v858 = vpop.xlane.xlu0 %857
        %859 = vadd.xlane.f32.xlu0 %v732
        %v860 = vpop.xlane.xlu0 %859
        %861 = vadd.xlane.f32.xlu0 %v734
        %v862 = vpop.xlane.xlu0 %861
        %v863 = vrcp.pop %v736
        %v864 = vrcp.pop %v738
        %v865 = vrcp.pop %v740
        %v866 = vrcp.pop %v742
        %v867 = vrcp.pop %v744
        %v868 = vrcp.pop %v746
        %v869 = vrcp.pop %v748
        %v870 = vrcp.pop %v750
        %v871 = vrcp.pop %v752
        %v872 = vrcp.pop %v754
        %v873 = vrcp.pop %v756
        %v874 = vrcp.pop %v758
        %v875 = vrcp.pop %v760
        %v876 = vrcp.pop %v762
        %v877 = vrcp.pop %v764
        %v878 = vrcp.pop %v766
        %v879 = vrcp.pop %v768
        %v880 = vrcp.pop %v770
        %v881 = vrcp.pop %v772
        %v882 = vrcp.pop %v774
        %v883 = vrcp.pop %v776
        %v884 = vrcp.pop %v778
        %v885 = vrcp.pop %v780
        %v886 = vrcp.pop %v782
        %v887 = vrcp.pop %v784
        %v888 = vrcp.pop %v786
        %v889 = vrcp.pop %v788
        %v890 = vrcp.pop %v790
        %v891 = vrcp.pop %v792
        %v892 = vrcp.pop %v794
        %v893 = vrcp.pop %v796
        %v894 = vrcp.pop %v798
        %v895 = vrcp.pop %v800
        %v896 = vrcp.pop %v802
        %v897 = vrcp.pop %v804
        %v898 = vrcp.pop %v806
        %v899 = vrcp.pop %v808
        %v900 = vrcp.pop %v810
        %v901 = vrcp.pop %v812
        %v902 = vrcp.pop %v814
        %v903 = vrcp.pop %v816
        %v904 = vrcp.pop %v818
        %v905 = vrcp.pop %v820
        %v906 = vrcp.pop %v822
        %v907 = vrcp.pop %v824
        %v908 = vrcp.pop %v826
        %v909 = vrcp.pop %v828
        %v910 = vrcp.pop %v830
        %v911 = vrcp.pop %v832
        %v912 = vrcp.pop %v834
        %v913 = vrcp.pop %v836
        %v914 = vrcp.pop %v838
        %v915 = vrcp.pop %v840
        %v916 = vrcp.pop %v842
        %v917 = vrcp.pop %v844
        %v918 = vrcp.pop %v846
        %v919 = vrcp.pop %v848
        %v920 = vrcp.pop %v850
        %v921 = vrcp.pop %v852
        %v922 = vrcp.pop %v854
        %v923 = vrcp.pop %v856
        %v924 = vrcp.pop %v858
        %v925 = vrcp.pop %v860
        %v926 = vrcp.pop %v862
        %v927 = vmul.f32 %v608, %v863
        %v928 = vmul.f32 %v610, %v864
        %v929 = vmul.f32 %v612, %v865
        %v930 = vmul.f32 %v614, %v866
        %v931 = vmul.f32 %v616, %v867
        %v932 = vmul.f32 %v618, %v868
        %v933 = vmul.f32 %v620, %v869
        %v934 = vmul.f32 %v622, %v870
        %v935 = vmul.f32 %v624, %v871
        %v936 = vmul.f32 %v626, %v872
        %v937 = vmul.f32 %v628, %v873
        %v938 = vmul.f32 %v630, %v874
        %v939 = vmul.f32 %v632, %v875
        %v940 = vmul.f32 %v634, %v876
        %v941 = vmul.f32 %v636, %v877
        %v942 = vmul.f32 %v638, %v878
        %v943 = vmul.f32 %v640, %v879
        %v944 = vmul.f32 %v642, %v880
        %v945 = vmul.f32 %v644, %v881
        %v946 = vmul.f32 %v646, %v882
        %v947 = vmul.f32 %v648, %v883
        %v948 = vmul.f32 %v650, %v884
        %v949 = vmul.f32 %v652, %v885
        %v950 = vmul.f32 %v654, %v886
        %v951 = vmul.f32 %v656, %v887
        %v952 = vmul.f32 %v658, %v888
        %v953 = vmul.f32 %v660, %v889
        %v954 = vmul.f32 %v662, %v890
        %v955 = vmul.f32 %v664, %v891
        %v956 = vmul.f32 %v666, %v892
        %v957 = vmul.f32 %v668, %v893
        %v958 = vmul.f32 %v670, %v894
        %v959 = vmul.f32 %v672, %v895
        %v960 = vmul.f32 %v674, %v896
        %v961 = vmul.f32 %v676, %v897
        %v962 = vmul.f32 %v678, %v898
        %v963 = vmul.f32 %v680, %v899
        %v964 = vmul.f32 %v682, %v900
        %v965 = vmul.f32 %v684, %v901
        %v966 = vmul.f32 %v686, %v902
        %v967 = vmul.f32 %v688, %v903
        %v968 = vmul.f32 %v690, %v904
        %v969 = vmul.f32 %v692, %v905
        %v970 = vmul.f32 %v694, %v906
        %v971 = vmul.f32 %v696, %v907
        %v972 = vmul.f32 %v698, %v908
        %v973 = vmul.f32 %v700, %v909
        %v974 = vmul.f32 %v702, %v910
        %v975 = vmul.f32 %v704, %v911
        %v976 = vmul.f32 %v706, %v912
        %v977 = vmul.f32 %v708, %v913
        %v978 = vmul.f32 %v710, %v914
        %v979 = vmul.f32 %v712, %v915
        %v980 = vmul.f32 %v714, %v916
        %v981 = vmul.f32 %v716, %v917
        %v982 = vmul.f32 %v718, %v918
        %v983 = vmul.f32 %v720, %v919
        %v984 = vmul.f32 %v722, %v920
        %v985 = vmul.f32 %v724, %v921
        %v986 = vmul.f32 %v726, %v922
        %v987 = vmul.f32 %v728, %v923
        %v988 = vmul.f32 %v730, %v924
        %v989 = vmul.f32 %v732, %v925
        %v990 = vmul.f32 %v734, %v926
        %991 = vst [vmem:[%s213] sm:$0xff] %v927
        %992 = vst [vmem:[%s213 + $0x8] sm:$0xff] %v928
        %993 = vst [vmem:[%s213 + $0x10] sm:$0xff] %v929
        %994 = vst [vmem:[%s213 + $0x18] sm:$0xff] %v930
        %995 = vst [vmem:[%s213 + $0x20] sm:$0xff] %v931
        %996 = vst [vmem:[%s213 + $0x28] sm:$0xff] %v932
        %997 = vst [vmem:[%s213 + $0x30] sm:$0xff] %v933
        %998 = vst [vmem:[%s213 + $0x38] sm:$0xff] %v934
        %999 = vst [vmem:[%s213 + $0x40] sm:$0xff] %v935
        %1000 = vst [vmem:[%s213 + $0x48] sm:$0xff] %v936
        %1001 = vst [vmem:[%s213 + $0x50] sm:$0xff] %v937
        %1002 = vst [vmem:[%s213 + $0x58] sm:$0xff] %v938
        %1003 = vst [vmem:[%s213 + $0x60] sm:$0xff] %v939
        %1004 = vst [vmem:[%s213 + $0x68] sm:$0xff] %v940
        %1005 = vst [vmem:[%s213 + $0x70] sm:$0xff] %v941
        %1006 = vst [vmem:[%s213 + $0x78] sm:$0xff] %v942
        %1007 = vst [vmem:[%s213 + $0x80] sm:$0xff] %v943
        %1008 = vst [vmem:[%s213 + $0x88] sm:$0xff] %v944
        %1009 = vst [vmem:[%s213 + $0x90] sm:$0xff] %v945
        %1010 = vst [vmem:[%s213 + $0x98] sm:$0xff] %v946
        %1011 = vst [vmem:[%s213 + $0xa0] sm:$0xff] %v947
        %1012 = vst [vmem:[%s213 + $0xa8] sm:$0xff] %v948
        %1013 = vst [vmem:[%s213 + $0xb0] sm:$0xff] %v949
        %1014 = vst [vmem:[%s213 + $0xb8] sm:$0xff] %v950
        %1015 = vst [vmem:[%s213 + $0xc0] sm:$0xff] %v951
        %1016 = vst [vmem:[%s213 + $0xc8] sm:$0xff] %v952
        %1017 = vst [vmem:[%s213 + $0xd0] sm:$0xff] %v953
        %1018 = vst [vmem:[%s213 + $0xd8] sm:$0xff] %v954
        %1019 = vst [vmem:[%s213 + $0xe0] sm:$0xff] %v955
        %1020 = vst [vmem:[%s213 + $0xe8] sm:$0xff] %v956
        %1021 = vst [vmem:[%s213 + $0xf0] sm:$0xff] %v957
        %1022 = vst [vmem:[%s213 + $0xf8] sm:$0xff] %v958
        %1023 = vst [vmem:[%s213 + $0x100] sm:$0xff] %v959
        %1024 = vst [vmem:[%s213 + $0x108] sm:$0xff] %v960
        %1025 = vst [vmem:[%s213 + $0x110] sm:$0xff] %v961
        %1026 = vst [vmem:[%s213 + $0x118] sm:$0xff] %v962
        %1027 = vst [vmem:[%s213 + $0x120] sm:$0xff] %v963
        %1028 = vst [vmem:[%s213 + $0x128] sm:$0xff] %v964
        %1029 = vst [vmem:[%s213 + $0x130] sm:$0xff] %v965
        %1030 = vst [vmem:[%s213 + $0x138] sm:$0xff] %v966
        %1031 = vst [vmem:[%s213 + $0x140] sm:$0xff] %v967
        %1032 = vst [vmem:[%s213 + $0x148] sm:$0xff] %v968
        %1033 = vst [vmem:[%s213 + $0x150] sm:$0xff] %v969
        %1034 = vst [vmem:[%s213 + $0x158] sm:$0xff] %v970
        %1035 = vst [vmem:[%s213 + $0x160] sm:$0xff] %v971
        %1036 = vst [vmem:[%s213 + $0x168] sm:$0xff] %v972
        %1037 = vst [vmem:[%s213 + $0x170] sm:$0xff] %v973
        %1038 = vst [vmem:[%s213 + $0x178] sm:$0xff] %v974
        %1039 = vst [vmem:[%s213 + $0x180] sm:$0xff] %v975
        %1040 = vst [vmem:[%s213 + $0x188] sm:$0xff] %v976
        %1041 = vst [vmem:[%s213 + $0x190] sm:$0xff] %v977
        %1042 = vst [vmem:[%s213 + $0x198] sm:$0xff] %v978
        %1043 = vst [vmem:[%s213 + $0x1a0] sm:$0xff] %v979
        %1044 = vst [vmem:[%s213 + $0x1a8] sm:$0xff] %v980
        %1045 = vst [vmem:[%s213 + $0x1b0] sm:$0xff] %v981
        %1046 = vst [vmem:[%s213 + $0x1b8] sm:$0xff] %v982
        %1047 = vst [vmem:[%s213 + $0x1c0] sm:$0xff] %v983
        %1048 = vst [vmem:[%s213 + $0x1c8] sm:$0xff] %v984
        %1049 = vst [vmem:[%s213 + $0x1d0] sm:$0xff] %v985
        %1050 = vst [vmem:[%s213 + $0x1d8] sm:$0xff] %v986
        %1051 = vst [vmem:[%s213 + $0x1e0] sm:$0xff] %v987
        %1052 = vst [vmem:[%s213 + $0x1e8] sm:$0xff] %v988
        %1053 = vst [vmem:[%s213 + $0x1f0] sm:$0xff] %v989
        %1054 = vst [vmem:[%s213 + $0x1f8] sm:$0xff] %v990
        %s1055 = sand.u32 %s98, 1
        %s1056 = scalar_lea.sflag [#allocation4], %s1055
        %s1057 = sand.u32 %s98, 1
        %s1058 = smul.addr %s1057, 512
        %s1059 = scalar_lea.vmem [#allocation7], %s1058
        // Predicated region
        $region37: #{tpu_custom_call.1} parent=27 // pred_check
          %p1060 = pneg %p108
        $region38: #{tpu_custom_call.1} parent=27 // pred_check_branch
          %1062 = sbr.rel (%p1060) target = $region40
        $region39: #{tpu_custom_call.1} parent=27 // pred_region
          %s1063 = smul.u32 64, %s27
          %s1065 = ssub.s32 8192, 8192
          %1066 = vsyncadd %s1056, %s1065
          %s1067 = smul.addr %s26, 64
          %s1068 = sadd.s32 %s1063, %s1067
          %s1069 = smul.addr %s1068, 128
          %s1070 = scalar_lea.hbm %s2, %s1069
          %s1071 = sshll.u32 %s1059, 4
          %s1072 = int_to_ptr.vmem [resolvable:$true] %s1071
          %1077 = dma.vmem_to_hbm [thread:$0]  %s1072, 8192, %s1070, %s1056, 128, 128, 8
        $region40: #{tpu_custom_call.1} parent=27 // pred_fallthru
          _
      $region28: #{tpu_custom_call.1} parent=5 // pred_fallthru
        _
      %p1078 = scmp.le.s32.totalorder 2, %s17
      // Predicated region
      $region41: #{tpu_custom_call.1} parent=5 // pred_check
        %p1079 = pneg %p1078
      $region42: #{tpu_custom_call.1} parent=5 // pred_check_branch
        %1081 = sbr.rel (%p1079) target = $region44
      $region43: #{tpu_custom_call.1} parent=5 // pred_region
        %s1082 = ssub.s32 %s17, 2
        // Predicated region
        $region45: #{tpu_custom_call.1} parent=43 // pred_check
          %p1083 = pneg %p114
        $region46: #{tpu_custom_call.1} parent=43 // pred_check_branch
          %1085 = sbr.rel (%p1083) target = $region48
        $region47: #{tpu_custom_call.1} parent=43 // pred_region
          %s1086 = sand.u32 %s99, 1
          %s1087 = scalar_lea.sflag [#allocation4], %s1086
          %s1088 = sand.u32 %s99, 1
          %s1089 = smul.addr %s1088, 512
          %s1090 = scalar_lea.vmem [#allocation7], %s1089
          %1091 = dma.done %s1087, 8192
        $region48: #{tpu_custom_call.1} parent=43 // pred_fallthru
          _
      $region44: #{tpu_custom_call.1} parent=5 // pred_fallthru
        _
    $region6: #{tpu_custom_call.1} parent=1 // loop_footer
      %s21 = sadd.s32 1, %s17
    $region7: #{tpu_custom_call.1} parent=1 // loop_footer_branch
      %16 = sbr.rel target = $region3
    $region8: #{tpu_custom_call.1} parent=1 // loop_exit
      _
    %1092 = vsyncpa [#allocation3], 1
    %s1093 = scalar_lea.sflag [#allocation3], 1
    %1094 = vsyncpa %s1093, 1
    %1095 = vsyncpa [#allocation6], 1
    %s1096 = scalar_lea.sflag [#allocation6], 1
    %1097 = vsyncpa %s1096, 1
    %1098 = vsyncpa [#allocation4], 1
    %s1099 = scalar_lea.sflag [#allocation4], 1
    %1100 = vsyncpa %s1099, 1

</llo_original>
